<compile_context>
chip_gen: v7x
topology: tpu7x:2x2x1
jax: 0.10.0
libtpu: 0.0.40
codegen_flags: <defaults>
</compile_context>

<pallas_src>
import jax
import jax.numpy as jnp
from jax import lax
from jax.experimental import pallas as pl
from jax.experimental.pallas import tpu as pltpu  # noqa: F401  (kept for TPU backend)


def _fused_linear_kernel(x_ref, w_ref, b_ref, o_ref):
    # One MXU push: (Mp, K) @ (N, K)^T via dot_general contracting both
    # operands on their last dim (no transposed weight copy needed), fused
    # bias add, single lane-dense store.
    acc = lax.dot_general(
        x_ref[...],
        w_ref[...],
        dimension_numbers=(((1,), (1,)), ((), ())),  # x @ W.T, torch-layout W
        preferred_element_type=jnp.float32,
    )
    o_ref[...] = (acc + b_ref[...]).astype(o_ref.dtype)


def fused_linear(x, w, b):
    """y = x @ w.T + b with torch-layout w (N, K), as a single Pallas step."""
    M, K = x.shape
    N, Kw = w.shape
    assert Kw == K and b.shape == (N,)

    # Sublane-align the row count (>= 8, multiple of 8) -> unmasked vld/vst.
    Mp = max(8, -(-M // 8) * 8)
    if Mp != M:
        x = jnp.pad(x, ((0, Mp - M), (0, 0)))

    b2 = b.reshape(1, N)  # 2-D so the bias tile is a lane-dense (1, N) block

    itemsize = jnp.dtype(x.dtype).itemsize
    bytes_accessed = (Mp * K + N * K + N + Mp * N) * itemsize
    # VMEM guard: everything sits in one (double-buffered) block.  Stay well
    # under the smallest scoped-VMEM default (16 MiB on v5e; v7x: 64 MiB phys).
    if 2 * bytes_accessed > 12 * 1024 * 1024:
        # TODO(synk): re-introduce K/N tiling if this helper is reused at
        # shapes where a single full-weight block no longer fits in VMEM.
        raise ValueError(
            f"single-block linear needs ~{2 * bytes_accessed} B VMEM; add tiling"
        )

    out = pl.pallas_call(
        _fused_linear_kernel,
        out_shape=jax.ShapeDtypeStruct((Mp, N), x.dtype),
        grid=(1,),
        in_specs=[
            pl.BlockSpec((Mp, K), lambda i: (0, 0)),  # fused activations
            pl.BlockSpec((N, K), lambda i: (0, 0)),   # torch-layout weight
            pl.BlockSpec((1, N), lambda i: (0, 0)),   # bias row
        ],
        out_specs=pl.BlockSpec((Mp, N), lambda i: (0, 0)),
        cost_estimate=pl.CostEstimate(
            flops=2 * Mp * N * K,
            transcendentals=0,
            bytes_accessed=bytes_accessed,
        ),
    )(x, w, b2)

    return out[:M] if Mp != M else out


def overall_model_forward(x1, x2, w, b):
    """overall_model.forward: shared Linear applied to both inputs, fused."""
    B1 = x1.shape[0]
    x = jnp.concatenate([x1, x2], axis=0)  # (B1+B2, K): weight read once
    y = fused_linear(x, w, b)
    return y[:B1], y[B1:]


if __name__ == "__main__":
    key = jax.random.PRNGKey(0)
    k1, k2, kb = jax.random.split(key, 3)

    # overall_model.final_dim = 640 (train_w = nn.Linear(640, 640)).
    B, D = 2, 640
    x1 = jax.random.normal(k1, (B, D), dtype=jnp.float32)
    x2 = jax.random.normal(k2, (B, D), dtype=jnp.float32)

    # Per the PyTorch spec: train_w[0].weight.data = eye(640) (torch (out, in)
    # layout, used untransposed by the kernel); the bias keeps its nn.Linear
    # default uniform(-1/sqrt(fan_in), 1/sqrt(fan_in)) init -> deterministic
    # stand-in here.
    w = jnp.eye(D, dtype=jnp.float32)
    bound = 1.0 / float(jnp.sqrt(jnp.float32(D)))
    b = jax.random.uniform(kb, (D,), dtype=jnp.float32, minval=-bound, maxval=bound)

    f1, f2 = overall_model_forward(x1, x2, w, b)
    f1 = jax.block_until_ready(f1)
    f2 = jax.block_until_ready(f2)

    # Reference: y = x @ W.T + b; with W = I this is exactly x + b.
    ref1 = x1 @ w.T + b
    ref2 = x2 @ w.T + b
    assert f1.shape == (B, D) and f2.shape == (B, D)
    assert f1.dtype == x1.dtype and f2.dtype == x2.dtype
    assert jnp.allclose(f1, ref1, atol=1e-3, rtol=1e-3), "mismatch on x1 path"
    assert jnp.allclose(f2, ref2, atol=1e-3, rtol=1e-3), "mismatch on x2 path"

    print("KERNEL_OK")
</pallas_src>

<mosaic_0001>
module attributes {stable_mosaic.version = 11 : i64} {
  func.func @_fused_linear_kernel(%arg0: i32, %arg1: memref<8x640xf32, #tpu.memory_space<vmem>>, %arg2: memref<640x640xf32, #tpu.memory_space<vmem>>, %arg3: memref<1x640xf32, #tpu.memory_space<vmem>>, %arg4: memref<8x640xf32, #tpu.memory_space<vmem>>) attributes {dimension_semantics = [#tpu.dimension_semantics<arbitrary>], iteration_bounds = array<i64: 1>, scalar_prefetch = 0 : i64, scratch_operands = 0 : i64, tpu.core_type = #tpu.core_type<tc>, window_params = [{pipeline_mode = #tpu.pipeline_mode<synchronous>, transform_indices = @transform_0, window_bounds = array<i64: 8, 640>}, {pipeline_mode = #tpu.pipeline_mode<synchronous>, transform_indices = @transform_1, window_bounds = array<i64: 640, 640>}, {pipeline_mode = #tpu.pipeline_mode<synchronous>, transform_indices = @transform_2, window_bounds = array<i64: 1, 640>}, {pipeline_mode = #tpu.pipeline_mode<synchronous>, transform_indices = @transform_3, window_bounds = array<i64: 8, 640>}]} {
    %c0 = arith.constant 0 : index
    %c0_0 = arith.constant 0 : index
    %0 = vector.load %arg1[%c0, %c0_0] : memref<8x640xf32, #tpu.memory_space<vmem>>, vector<8x640xf32>
    %c0_1 = arith.constant 0 : index
    %c0_2 = arith.constant 0 : index
    %1 = vector.load %arg2[%c0_1, %c0_2] : memref<640x640xf32, #tpu.memory_space<vmem>>, vector<640x640xf32>
    %cst = arith.constant dense<0.000000e+00> : vector<8x640xf32>
    %2 = tpu.matmul %0, %1, %cst {dimension_numbers = #tpu.dot_dimension_numbers<[1], [1], [0], [0], [0, 0, 1, 0], [], []>} : vector<8x640xf32>, vector<640x640xf32>, vector<8x640xf32> -> vector<8x640xf32>
    %c0_3 = arith.constant 0 : index
    %c0_4 = arith.constant 0 : index
    %3 = vector.load %arg3[%c0_3, %c0_4] : memref<1x640xf32, #tpu.memory_space<vmem>>, vector<1x640xf32>
    %4 = vector.broadcast %3 : vector<1x640xf32> to vector<8x640xf32>
    %5 = arith.addf %2, %4 : vector<8x640xf32>
    %c0_5 = arith.constant 0 : index
    %c0_6 = arith.constant 0 : index
    %6 = vector.load %arg4[%c0_5, %c0_6] : memref<8x640xf32, #tpu.memory_space<vmem>>, vector<8x640xf32>
    tpu.vector_store %arg4[%c0_5, %c0_6], %5 {strides = array<i32>} : memref<8x640xf32, #tpu.memory_space<vmem>>, vector<8x640xf32>,
    return
  }
  func.func @transform_0(%arg0: i32) -> (i32, i32) {
    %c0_i32 = arith.constant 0 : i32
    %c0_i32_0 = arith.constant 0 : i32
    %c0_i32_1 = arith.constant 0 : i32
    return %c0_i32, %c0_i32_0 : i32, i32
  }
  func.func @transform_1(%arg0: i32) -> (i32, i32) {
    %c0_i32 = arith.constant 0 : i32
    %c0_i32_0 = arith.constant 0 : i32
    %c0_i32_1 = arith.constant 0 : i32
    return %c0_i32, %c0_i32_0 : i32, i32
  }
  func.func @transform_2(%arg0: i32) -> (i32, i32) {
    %c0_i32 = arith.constant 0 : i32
    %c0_i32_0 = arith.constant 0 : i32
    %c0_i32_1 = arith.constant 0 : i32
    return %c0_i32, %c0_i32_0 : i32, i32
  }
  func.func @transform_3(%arg0: i32) -> (i32, i32) {
    %c0_i32 = arith.constant 0 : i32
    %c0_i32_0 = arith.constant 0 : i32
    %c0_i32_1 = arith.constant 0 : i32
    return %c0_i32, %c0_i32_0 : i32, i32
  }
}

</mosaic_0001>

<llo_original>
// kernel: tpu_custom_call.1
$region0: #{tpu_custom_call.1}
  #allocation0 [shape = 'u32[]', space=smem, size = 0x4, offset = 0x4, fixed_abs, tag = 'smem constant byte address 0x4 - core index']
  #allocation1 [shape = 'u32[144,128]{1,0:T(1,128)}', space=vmem, size = 0x12000, scoped, tag = 'internal scratch']
  %s0 = inlined_call_operand.hbm [shape: f32[8,640], index: 0, kind: input, shape index: {}]
  %s1 = inlined_call_operand.hbm [shape: f32[640,640], index: 1, kind: input, shape index: {}]
  %s2 = inlined_call_operand.hbm [shape: f32[1,640], index: 2, kind: input, shape index: {}]
  %s3 = inlined_call_operand.hbm [shape: f32[8,640], index: 3, kind: output, shape index: {}]
  %s4 = sld [smem:[#allocation0]]
  $region34: #{tpu_custom_call.1} parent=0
    _
  %s6 = ssub.s32 1, %s4
  %s7 = scalar_select 0, %s6, %s4
  $region1: #{tpu_custom_call.1} parent=0
    #allocation2 [shape = 'u8[20480]{0}', space=vmem, size = 0x5000, scoped, tag = 'input window, operand 0, single buffered']
    #allocation3 [shape = 's32[1]{0}', space=sflag, size = 0x4, scoped, tag = 'scoped memory for tpu_custom_call.1']
    #allocation4 [shape = 's32[1]{0}', space=sflag, size = 0x4, scoped, tag = 'scoped memory for tpu_custom_call.1']
    #allocation5 [shape = 'u8[1638400]{0}', space=vmem, size = 0x190000, scoped, tag = 'input window, operand 1, single buffered']
    #allocation6 [shape = 's32[1]{0}', space=sflag, size = 0x4, scoped, tag = 'scoped memory for tpu_custom_call.1']
    #allocation7 [shape = 'u8[2560]{0}', space=vmem, size = 0xc00, scoped, tag = 'input window, operand 2, single buffered']
    #allocation8 [shape = 'u8[20480]{0}', space=vmem, size = 0x5000, scoped, tag = 'output window, operand 0, single buffered']
    %8 = vsyncpa [#allocation3], 0
    %9 = vsyncpa [#allocation6], 0
    %10 = vsyncpa [#allocation4], 0
    // Predicated region
    $region2: #{tpu_custom_call.1} parent=1 // pred_check
      _
    $region3: #{tpu_custom_call.1} parent=1 // pred_check_branch
      %12 = sbr.rel (0) target = $region5
    $region4: #{tpu_custom_call.1} parent=1 // pred_region
      %s14 = ssub.s32 640, 640
      %15 = vsyncadd [#allocation3], %s14
      %s17 = sshll.u32 [#allocation2], 4
      %s18 = int_to_ptr.vmem [resolvable:$true] %s17
      %20 = dma.hbm_to_vmem [thread:$0]  %s0, 640, %s18, [#allocation3]
    $region5: #{tpu_custom_call.1} parent=1 // pred_fallthru
      _
    // Predicated region
    $region6: #{tpu_custom_call.1} parent=1 // pred_check
      _
    $region7: #{tpu_custom_call.1} parent=1 // pred_check_branch
      %22 = sbr.rel (0) target = $region9
    $region8: #{tpu_custom_call.1} parent=1 // pred_region
      %s24 = ssub.s32 51200, 51200
      %25 = vsyncadd [#allocation6], %s24
      %s26 = sshll.u32 [#allocation5], 4
      %s27 = int_to_ptr.vmem [resolvable:$true] %s26
      %32 = dma.hbm_to_vmem [thread:$0]  %s1, 51200, %s27, [#allocation6], 640, 640, 40
    $region9: #{tpu_custom_call.1} parent=1 // pred_fallthru
      _
    // Predicated region
    $region10: #{tpu_custom_call.1} parent=1 // pred_check
      _
    $region11: #{tpu_custom_call.1} parent=1 // pred_check_branch
      %34 = sbr.rel (0) target = $region13
    $region12: #{tpu_custom_call.1} parent=1 // pred_region
      %s36 = ssub.s32 80, 80
      %37 = vsyncadd [#allocation6], %s36
      %s39 = sshll.u32 [#allocation7], 4
      %s40 = int_to_ptr.vmem [resolvable:$true] %s39
      %42 = dma.hbm_to_vmem [thread:$0]  %s2, 80, %s40, [#allocation6]
    $region13: #{tpu_custom_call.1} parent=1 // pred_fallthru
      _
    // Predicated region
    $region14: #{tpu_custom_call.1} parent=1 // pred_check
      _
    $region15: #{tpu_custom_call.1} parent=1 // pred_check_branch
      %44 = sbr.rel (0) target = $region17
    $region16: #{tpu_custom_call.1} parent=1 // pred_region
      %45 = dma.done [#allocation3], 640
    $region17: #{tpu_custom_call.1} parent=1 // pred_fallthru
      _
    // Predicated region
    $region18: #{tpu_custom_call.1} parent=1 // pred_check
      _
    $region19: #{tpu_custom_call.1} parent=1 // pred_check_branch
      %47 = sbr.rel (0) target = $region21
    $region20: #{tpu_custom_call.1} parent=1 // pred_region
      %48 = dma.done [#allocation6], 51200
    $region21: #{tpu_custom_call.1} parent=1 // pred_fallthru
      _
    // Predicated region
    $region22: #{tpu_custom_call.1} parent=1 // pred_check
      _
    $region23: #{tpu_custom_call.1} parent=1 // pred_check_branch
      %50 = sbr.rel (0) target = $region25
    $region24: #{tpu_custom_call.1} parent=1 // pred_region
      %51 = dma.done [#allocation6], 80
    $region25: #{tpu_custom_call.1} parent=1 // pred_fallthru
      _
    %v52 = vld [vmem:[#allocation2] sm:$0xff]
    %v53 = vld [vmem:[#allocation2 + $0x8] sm:$0xff]
    %v54 = vld [vmem:[#allocation2 + $0x10] sm:$0xff]
    %v55 = vld [vmem:[#allocation2 + $0x18] sm:$0xff]
    %v56 = vld [vmem:[#allocation2 + $0x20] sm:$0xff]
    %v57 = vld [vmem:[#allocation5] sm:$0xff]
    %v58 = vld [vmem:[#allocation5 + $0x8] sm:$0xff]
    %v59 = vld [vmem:[#allocation5 + $0x10] sm:$0xff]
    %v60 = vld [vmem:[#allocation5 + $0x18] sm:$0xff]
    %v61 = vld [vmem:[#allocation5 + $0x20] sm:$0xff]
    %v62 = vld [vmem:[#allocation5 + $0x28] sm:$0xff]
    %v63 = vld [vmem:[#allocation5 + $0x30] sm:$0xff]
    %v64 = vld [vmem:[#allocation5 + $0x38] sm:$0xff]
    %v65 = vld [vmem:[#allocation5 + $0x40] sm:$0xff]
    %v66 = vld [vmem:[#allocation5 + $0x48] sm:$0xff]
    %v67 = vld [vmem:[#allocation5 + $0x50] sm:$0xff]
    %v68 = vld [vmem:[#allocation5 + $0x58] sm:$0xff]
    %v69 = vld [vmem:[#allocation5 + $0x60] sm:$0xff]
    %v70 = vld [vmem:[#allocation5 + $0x68] sm:$0xff]
    %v71 = vld [vmem:[#allocation5 + $0x70] sm:$0xff]
    %v72 = vld [vmem:[#allocation5 + $0x78] sm:$0xff]
    %v73 = vld [vmem:[#allocation5 + $0x80] sm:$0xff]
    %v74 = vld [vmem:[#allocation5 + $0x88] sm:$0xff]
    %v75 = vld [vmem:[#allocation5 + $0x90] sm:$0xff]
    %v76 = vld [vmem:[#allocation5 + $0x98] sm:$0xff]
    %v77 = vld [vmem:[#allocation5 + $0xa0] sm:$0xff]
    %v78 = vld [vmem:[#allocation5 + $0xa8] sm:$0xff]
    %v79 = vld [vmem:[#allocation5 + $0xb0] sm:$0xff]
    %v80 = vld [vmem:[#allocation5 + $0xb8] sm:$0xff]
    %v81 = vld [vmem:[#allocation5 + $0xc0] sm:$0xff]
    %v82 = vld [vmem:[#allocation5 + $0xc8] sm:$0xff]
    %v83 = vld [vmem:[#allocation5 + $0xd0] sm:$0xff]
    %v84 = vld [vmem:[#allocation5 + $0xd8] sm:$0xff]
    %v85 = vld [vmem:[#allocation5 + $0xe0] sm:$0xff]
    %v86 = vld [vmem:[#allocation5 + $0xe8] sm:$0xff]
    %v87 = vld [vmem:[#allocation5 + $0xf0] sm:$0xff]
    %v88 = vld [vmem:[#allocation5 + $0xf8] sm:$0xff]
    %v89 = vld [vmem:[#allocation5 + $0x100] sm:$0xff]
    %v90 = vld [vmem:[#allocation5 + $0x108] sm:$0xff]
    %v91 = vld [vmem:[#allocation5 + $0x110] sm:$0xff]
    %v92 = vld [vmem:[#allocation5 + $0x118] sm:$0xff]
    %v93 = vld [vmem:[#allocation5 + $0x120] sm:$0xff]
    %v94 = vld [vmem:[#allocation5 + $0x128] sm:$0xff]
    %v95 = vld [vmem:[#allocation5 + $0x130] sm:$0xff]
    %v96 = vld [vmem:[#allocation5 + $0x138] sm:$0xff]
    %v97 = vld [vmem:[#allocation5 + $0x140] sm:$0xff]
    %v98 = vld [vmem:[#allocation5 + $0x148] sm:$0xff]
    %v99 = vld [vmem:[#allocation5 + $0x150] sm:$0xff]
    %v100 = vld [vmem:[#allocation5 + $0x158] sm:$0xff]
    %v101 = vld [vmem:[#allocation5 + $0x160] sm:$0xff]
    %v102 = vld [vmem:[#allocation5 + $0x168] sm:$0xff]
    %v103 = vld [vmem:[#allocation5 + $0x170] sm:$0xff]
    %v104 = vld [vmem:[#allocation5 + $0x178] sm:$0xff]
    %v105 = vld [vmem:[#allocation5 + $0x180] sm:$0xff]
    %v106 = vld [vmem:[#allocation5 + $0x188] sm:$0xff]
    %v107 = vld [vmem:[#allocation5 + $0x190] sm:$0xff]
    %v108 = vld [vmem:[#allocation5 + $0x198] sm:$0xff]
    %v109 = vld [vmem:[#allocation5 + $0x1a0] sm:$0xff]
    %v110 = vld [vmem:[#allocation5 + $0x1a8] sm:$0xff]
    %v111 = vld [vmem:[#allocation5 + $0x1b0] sm:$0xff]
    %v112 = vld [vmem:[#allocation5 + $0x1b8] sm:$0xff]
    %v113 = vld [vmem:[#allocation5 + $0x1c0] sm:$0xff]
    %v114 = vld [vmem:[#allocation5 + $0x1c8] sm:$0xff]
    %v115 = vld [vmem:[#allocation5 + $0x1d0] sm:$0xff]
    %v116 = vld [vmem:[#allocation5 + $0x1d8] sm:$0xff]
    %v117 = vld [vmem:[#allocation5 + $0x1e0] sm:$0xff]
    %v118 = vld [vmem:[#allocation5 + $0x1e8] sm:$0xff]
    %v119 = vld [vmem:[#allocation5 + $0x1f0] sm:$0xff]
    %v120 = vld [vmem:[#allocation5 + $0x1f8] sm:$0xff]
    %v121 = vld [vmem:[#allocation5 + $0x200] sm:$0xff]
    %v122 = vld [vmem:[#allocation5 + $0x208] sm:$0xff]
    %v123 = vld [vmem:[#allocation5 + $0x210] sm:$0xff]
    %v124 = vld [vmem:[#allocation5 + $0x218] sm:$0xff]
    %v125 = vld [vmem:[#allocation5 + $0x220] sm:$0xff]
    %v126 = vld [vmem:[#allocation5 + $0x228] sm:$0xff]
    %v127 = vld [vmem:[#allocation5 + $0x230] sm:$0xff]
    %v128 = vld [vmem:[#allocation5 + $0x238] sm:$0xff]
    %v129 = vld [vmem:[#allocation5 + $0x240] sm:$0xff]
    %v130 = vld [vmem:[#allocation5 + $0x248] sm:$0xff]
    %v131 = vld [vmem:[#allocation5 + $0x250] sm:$0xff]
    %v132 = vld [vmem:[#allocation5 + $0x258] sm:$0xff]
    %v133 = vld [vmem:[#allocation5 + $0x260] sm:$0xff]
    %v134 = vld [vmem:[#allocation5 + $0x268] sm:$0xff]
    %v135 = vld [vmem:[#allocation5 + $0x270] sm:$0xff]
    %v136 = vld [vmem:[#allocation5 + $0x278] sm:$0xff]
    %v137 = vld [vmem:[#allocation5 + $0x280] sm:$0xff]
    %v138 = vld [vmem:[#allocation5 + $0x288] sm:$0xff]
    %v139 = vld [vmem:[#allocation5 + $0x290] sm:$0xff]
    %v140 = vld [vmem:[#allocation5 + $0x298] sm:$0xff]
    %v141 = vld [vmem:[#allocation5 + $0x2a0] sm:$0xff]
    %v142 = vld [vmem:[#allocation5 + $0x2a8] sm:$0xff]
    %v143 = vld [vmem:[#allocation5 + $0x2b0] sm:$0xff]
    %v144 = vld [vmem:[#allocation5 + $0x2b8] sm:$0xff]
    %v145 = vld [vmem:[#allocation5 + $0x2c0] sm:$0xff]
    %v146 = vld [vmem:[#allocation5 + $0x2c8] sm:$0xff]
    %v147 = vld [vmem:[#allocation5 + $0x2d0] sm:$0xff]
    %v148 = vld [vmem:[#allocation5 + $0x2d8] sm:$0xff]
    %v149 = vld [vmem:[#allocation5 + $0x2e0] sm:$0xff]
    %v150 = vld [vmem:[#allocation5 + $0x2e8] sm:$0xff]
    %v151 = vld [vmem:[#allocation5 + $0x2f0] sm:$0xff]
    %v152 = vld [vmem:[#allocation5 + $0x2f8] sm:$0xff]
    %v153 = vld [vmem:[#allocation5 + $0x300] sm:$0xff]
    %v154 = vld [vmem:[#allocation5 + $0x308] sm:$0xff]
    %v155 = vld [vmem:[#allocation5 + $0x310] sm:$0xff]
    %v156 = vld [vmem:[#allocation5 + $0x318] sm:$0xff]
    %v157 = vld [vmem:[#allocation5 + $0x320] sm:$0xff]
    %v158 = vld [vmem:[#allocation5 + $0x328] sm:$0xff]
    %v159 = vld [vmem:[#allocation5 + $0x330] sm:$0xff]
    %v160 = vld [vmem:[#allocation5 + $0x338] sm:$0xff]
    %v161 = vld [vmem:[#allocation5 + $0x340] sm:$0xff]
    %v162 = vld [vmem:[#allocation5 + $0x348] sm:$0xff]
    %v163 = vld [vmem:[#allocation5 + $0x350] sm:$0xff]
    %v164 = vld [vmem:[#allocation5 + $0x358] sm:$0xff]
    %v165 = vld [vmem:[#allocation5 + $0x360] sm:$0xff]
    %v166 = vld [vmem:[#allocation5 + $0x368] sm:$0xff]
    %v167 = vld [vmem:[#allocation5 + $0x370] sm:$0xff]
    %v168 = vld [vmem:[#allocation5 + $0x378] sm:$0xff]
    %v169 = vld [vmem:[#allocation5 + $0x380] sm:$0xff]
    %v170 = vld [vmem:[#allocation5 + $0x388] sm:$0xff]
    %v171 = vld [vmem:[#allocation5 + $0x390] sm:$0xff]
    %v172 = vld [vmem:[#allocation5 + $0x398] sm:$0xff]
    %v173 = vld [vmem:[#allocation5 + $0x3a0] sm:$0xff]
    %v174 = vld [vmem:[#allocation5 + $0x3a8] sm:$0xff]
    %v175 = vld [vmem:[#allocation5 + $0x3b0] sm:$0xff]
    %v176 = vld [vmem:[#allocation5 + $0x3b8] sm:$0xff]
    %v177 = vld [vmem:[#allocation5 + $0x3c0] sm:$0xff]
    %v178 = vld [vmem:[#allocation5 + $0x3c8] sm:$0xff]
    %v179 = vld [vmem:[#allocation5 + $0x3d0] sm:$0xff]
    %v180 = vld [vmem:[#allocation5 + $0x3d8] sm:$0xff]
    %v181 = vld [vmem:[#allocation5 + $0x3e0] sm:$0xff]
    %v182 = vld [vmem:[#allocation5 + $0x3e8] sm:$0xff]
    %v183 = vld [vmem:[#allocation5 + $0x3f0] sm:$0xff]
    %v184 = vld [vmem:[#allocation5 + $0x3f8] sm:$0xff]
    %v185 = vld [vmem:[#allocation5 + $0x400] sm:$0xff]
    %v186 = vld [vmem:[#allocation5 + $0x408] sm:$0xff]
    %v187 = vld [vmem:[#allocation5 + $0x410] sm:$0xff]
    %v188 = vld [vmem:[#allocation5 + $0x418] sm:$0xff]
    %v189 = vld [vmem:[#allocation5 + $0x420] sm:$0xff]
    %v190 = vld [vmem:[#allocation5 + $0x428] sm:$0xff]
    %v191 = vld [vmem:[#allocation5 + $0x430] sm:$0xff]
    %v192 = vld [vmem:[#allocation5 + $0x438] sm:$0xff]
    %v193 = vld [vmem:[#allocation5 + $0x440] sm:$0xff]
    %v194 = vld [vmem:[#allocation5 + $0x448] sm:$0xff]
    %v195 = vld [vmem:[#allocation5 + $0x450] sm:$0xff]
    %v196 = vld [vmem:[#allocation5 + $0x458] sm:$0xff]
    %v197 = vld [vmem:[#allocation5 + $0x460] sm:$0xff]
    %v198 = vld [vmem:[#allocation5 + $0x468] sm:$0xff]
    %v199 = vld [vmem:[#allocation5 + $0x470] sm:$0xff]
    %v200 = vld [vmem:[#allocation5 + $0x478] sm:$0xff]
    %v201 = vld [vmem:[#allocation5 + $0x480] sm:$0xff]
    %v202 = vld [vmem:[#allocation5 + $0x488] sm:$0xff]
    %v203 = vld [vmem:[#allocation5 + $0x490] sm:$0xff]
    %v204 = vld [vmem:[#allocation5 + $0x498] sm:$0xff]
    %v205 = vld [vmem:[#allocation5 + $0x4a0] sm:$0xff]
    %v206 = vld [vmem:[#allocation5 + $0x4a8] sm:$0xff]
    %v207 = vld [vmem:[#allocation5 + $0x4b0] sm:$0xff]
    %v208 = vld [vmem:[#allocation5 + $0x4b8] sm:$0xff]
    %v209 = vld [vmem:[#allocation5 + $0x4c0] sm:$0xff]
    %v210 = vld [vmem:[#allocation5 + $0x4c8] sm:$0xff]
    %v211 = vld [vmem:[#allocation5 + $0x4d0] sm:$0xff]
    %v212 = vld [vmem:[#allocation5 + $0x4d8] sm:$0xff]
    %v213 = vld [vmem:[#allocation5 + $0x4e0] sm:$0xff]
    %v214 = vld [vmem:[#allocation5 + $0x4e8] sm:$0xff]
    %v215 = vld [vmem:[#allocation5 + $0x4f0] sm:$0xff]
    %v216 = vld [vmem:[#allocation5 + $0x4f8] sm:$0xff]
    %v217 = vld [vmem:[#allocation5 + $0x500] sm:$0xff]
    %v218 = vld [vmem:[#allocation5 + $0x508] sm:$0xff]
    %v219 = vld [vmem:[#allocation5 + $0x510] sm:$0xff]
    %v220 = vld [vmem:[#allocation5 + $0x518] sm:$0xff]
    %v221 = vld [vmem:[#allocation5 + $0x520] sm:$0xff]
    %v222 = vld [vmem:[#allocation5 + $0x528] sm:$0xff]
    %v223 = vld [vmem:[#allocation5 + $0x530] sm:$0xff]
    %v224 = vld [vmem:[#allocation5 + $0x538] sm:$0xff]
    %v225 = vld [vmem:[#allocation5 + $0x540] sm:$0xff]
    %v226 = vld [vmem:[#allocation5 + $0x548] sm:$0xff]
    %v227 = vld [vmem:[#allocation5 + $0x550] sm:$0xff]
    %v228 = vld [vmem:[#allocation5 + $0x558] sm:$0xff]
    %v229 = vld [vmem:[#allocation5 + $0x560] sm:$0xff]
    %v230 = vld [vmem:[#allocation5 + $0x568] sm:$0xff]
    %v231 = vld [vmem:[#allocation5 + $0x570] sm:$0xff]
    %v232 = vld [vmem:[#allocation5 + $0x578] sm:$0xff]
    %v233 = vld [vmem:[#allocation5 + $0x580] sm:$0xff]
    %v234 = vld [vmem:[#allocation5 + $0x588] sm:$0xff]
    %v235 = vld [vmem:[#allocation5 + $0x590] sm:$0xff]
    %v236 = vld [vmem:[#allocation5 + $0x598] sm:$0xff]
    %v237 = vld [vmem:[#allocation5 + $0x5a0] sm:$0xff]
    %v238 = vld [vmem:[#allocation5 + $0x5a8] sm:$0xff]
    %v239 = vld [vmem:[#allocation5 + $0x5b0] sm:$0xff]
    %v240 = vld [vmem:[#allocation5 + $0x5b8] sm:$0xff]
    %v241 = vld [vmem:[#allocation5 + $0x5c0] sm:$0xff]
    %v242 = vld [vmem:[#allocation5 + $0x5c8] sm:$0xff]
    %v243 = vld [vmem:[#allocation5 + $0x5d0] sm:$0xff]
    %v244 = vld [vmem:[#allocation5 + $0x5d8] sm:$0xff]
    %v245 = vld [vmem:[#allocation5 + $0x5e0] sm:$0xff]
    %v246 = vld [vmem:[#allocation5 + $0x5e8] sm:$0xff]
    %v247 = vld [vmem:[#allocation5 + $0x5f0] sm:$0xff]
    %v248 = vld [vmem:[#allocation5 + $0x5f8] sm:$0xff]
    %v249 = vld [vmem:[#allocation5 + $0x600] sm:$0xff]
    %v250 = vld [vmem:[#allocation5 + $0x608] sm:$0xff]
    %v251 = vld [vmem:[#allocation5 + $0x610] sm:$0xff]
    %v252 = vld [vmem:[#allocation5 + $0x618] sm:$0xff]
    %v253 = vld [vmem:[#allocation5 + $0x620] sm:$0xff]
    %v254 = vld [vmem:[#allocation5 + $0x628] sm:$0xff]
    %v255 = vld [vmem:[#allocation5 + $0x630] sm:$0xff]
    %v256 = vld [vmem:[#allocation5 + $0x638] sm:$0xff]
    %v257 = vld [vmem:[#allocation5 + $0x640] sm:$0xff]
    %v258 = vld [vmem:[#allocation5 + $0x648] sm:$0xff]
    %v259 = vld [vmem:[#allocation5 + $0x650] sm:$0xff]
    %v260 = vld [vmem:[#allocation5 + $0x658] sm:$0xff]
    %v261 = vld [vmem:[#allocation5 + $0x660] sm:$0xff]
    %v262 = vld [vmem:[#allocation5 + $0x668] sm:$0xff]
    %v263 = vld [vmem:[#allocation5 + $0x670] sm:$0xff]
    %v264 = vld [vmem:[#allocation5 + $0x678] sm:$0xff]
    %v265 = vld [vmem:[#allocation5 + $0x680] sm:$0xff]
    %v266 = vld [vmem:[#allocation5 + $0x688] sm:$0xff]
    %v267 = vld [vmem:[#allocation5 + $0x690] sm:$0xff]
    %v268 = vld [vmem:[#allocation5 + $0x698] sm:$0xff]
    %v269 = vld [vmem:[#allocation5 + $0x6a0] sm:$0xff]
    %v270 = vld [vmem:[#allocation5 + $0x6a8] sm:$0xff]
    %v271 = vld [vmem:[#allocation5 + $0x6b0] sm:$0xff]
    %v272 = vld [vmem:[#allocation5 + $0x6b8] sm:$0xff]
    %v273 = vld [vmem:[#allocation5 + $0x6c0] sm:$0xff]
    %v274 = vld [vmem:[#allocation5 + $0x6c8] sm:$0xff]
    %v275 = vld [vmem:[#allocation5 + $0x6d0] sm:$0xff]
    %v276 = vld [vmem:[#allocation5 + $0x6d8] sm:$0xff]
    %v277 = vld [vmem:[#allocation5 + $0x6e0] sm:$0xff]
    %v278 = vld [vmem:[#allocation5 + $0x6e8] sm:$0xff]
    %v279 = vld [vmem:[#allocation5 + $0x6f0] sm:$0xff]
    %v280 = vld [vmem:[#allocation5 + $0x6f8] sm:$0xff]
    %v281 = vld [vmem:[#allocation5 + $0x700] sm:$0xff]
    %v282 = vld [vmem:[#allocation5 + $0x708] sm:$0xff]
    %v283 = vld [vmem:[#allocation5 + $0x710] sm:$0xff]
    %v284 = vld [vmem:[#allocation5 + $0x718] sm:$0xff]
    %v285 = vld [vmem:[#allocation5 + $0x720] sm:$0xff]
    %v286 = vld [vmem:[#allocation5 + $0x728] sm:$0xff]
    %v287 = vld [vmem:[#allocation5 + $0x730] sm:$0xff]
    %v288 = vld [vmem:[#allocation5 + $0x738] sm:$0xff]
    %v289 = vld [vmem:[#allocation5 + $0x740] sm:$0xff]
    %v290 = vld [vmem:[#allocation5 + $0x748] sm:$0xff]
    %v291 = vld [vmem:[#allocation5 + $0x750] sm:$0xff]
    %v292 = vld [vmem:[#allocation5 + $0x758] sm:$0xff]
    %v293 = vld [vmem:[#allocation5 + $0x760] sm:$0xff]
    %v294 = vld [vmem:[#allocation5 + $0x768] sm:$0xff]
    %v295 = vld [vmem:[#allocation5 + $0x770] sm:$0xff]
    %v296 = vld [vmem:[#allocation5 + $0x778] sm:$0xff]
    %v297 = vld [vmem:[#allocation5 + $0x780] sm:$0xff]
    %v298 = vld [vmem:[#allocation5 + $0x788] sm:$0xff]
    %v299 = vld [vmem:[#allocation5 + $0x790] sm:$0xff]
    %v300 = vld [vmem:[#allocation5 + $0x798] sm:$0xff]
    %v301 = vld [vmem:[#allocation5 + $0x7a0] sm:$0xff]
    %v302 = vld [vmem:[#allocation5 + $0x7a8] sm:$0xff]
    %v303 = vld [vmem:[#allocation5 + $0x7b0] sm:$0xff]
    %v304 = vld [vmem:[#allocation5 + $0x7b8] sm:$0xff]
    %v305 = vld [vmem:[#allocation5 + $0x7c0] sm:$0xff]
    %v306 = vld [vmem:[#allocation5 + $0x7c8] sm:$0xff]
    %v307 = vld [vmem:[#allocation5 + $0x7d0] sm:$0xff]
    %v308 = vld [vmem:[#allocation5 + $0x7d8] sm:$0xff]
    %v309 = vld [vmem:[#allocation5 + $0x7e0] sm:$0xff]
    %v310 = vld [vmem:[#allocation5 + $0x7e8] sm:$0xff]
    %v311 = vld [vmem:[#allocation5 + $0x7f0] sm:$0xff]
    %v312 = vld [vmem:[#allocation5 + $0x7f8] sm:$0xff]
    %v313 = vld [vmem:[#allocation5 + $0x800] sm:$0xff]
    %v314 = vld [vmem:[#allocation5 + $0x808] sm:$0xff]
    %v315 = vld [vmem:[#allocation5 + $0x810] sm:$0xff]
    %v316 = vld [vmem:[#allocation5 + $0x818] sm:$0xff]
    %v317 = vld [vmem:[#allocation5 + $0x820] sm:$0xff]
    %v318 = vld [vmem:[#allocation5 + $0x828] sm:$0xff]
    %v319 = vld [vmem:[#allocation5 + $0x830] sm:$0xff]
    %v320 = vld [vmem:[#allocation5 + $0x838] sm:$0xff]
    %v321 = vld [vmem:[#allocation5 + $0x840] sm:$0xff]
    %v322 = vld [vmem:[#allocation5 + $0x848] sm:$0xff]
    %v323 = vld [vmem:[#allocation5 + $0x850] sm:$0xff]
    %v324 = vld [vmem:[#allocation5 + $0x858] sm:$0xff]
    %v325 = vld [vmem:[#allocation5 + $0x860] sm:$0xff]
    %v326 = vld [vmem:[#allocation5 + $0x868] sm:$0xff]
    %v327 = vld [vmem:[#allocation5 + $0x870] sm:$0xff]
    %v328 = vld [vmem:[#allocation5 + $0x878] sm:$0xff]
    %v329 = vld [vmem:[#allocation5 + $0x880] sm:$0xff]
    %v330 = vld [vmem:[#allocation5 + $0x888] sm:$0xff]
    %v331 = vld [vmem:[#allocation5 + $0x890] sm:$0xff]
    %v332 = vld [vmem:[#allocation5 + $0x898] sm:$0xff]
    %v333 = vld [vmem:[#allocation5 + $0x8a0] sm:$0xff]
    %v334 = vld [vmem:[#allocation5 + $0x8a8] sm:$0xff]
    %v335 = vld [vmem:[#allocation5 + $0x8b0] sm:$0xff]
    %v336 = vld [vmem:[#allocation5 + $0x8b8] sm:$0xff]
    %v337 = vld [vmem:[#allocation5 + $0x8c0] sm:$0xff]
    %v338 = vld [vmem:[#allocation5 + $0x8c8] sm:$0xff]
    %v339 = vld [vmem:[#allocation5 + $0x8d0] sm:$0xff]
    %v340 = vld [vmem:[#allocation5 + $0x8d8] sm:$0xff]
    %v341 = vld [vmem:[#allocation5 + $0x8e0] sm:$0xff]
    %v342 = vld [vmem:[#allocation5 + $0x8e8] sm:$0xff]
    %v343 = vld [vmem:[#allocation5 + $0x8f0] sm:$0xff]
    %v344 = vld [vmem:[#allocation5 + $0x8f8] sm:$0xff]
    %v345 = vld [vmem:[#allocation5 + $0x900] sm:$0xff]
    %v346 = vld [vmem:[#allocation5 + $0x908] sm:$0xff]
    %v347 = vld [vmem:[#allocation5 + $0x910] sm:$0xff]
    %v348 = vld [vmem:[#allocation5 + $0x918] sm:$0xff]
    %v349 = vld [vmem:[#allocation5 + $0x920] sm:$0xff]
    %v350 = vld [vmem:[#allocation5 + $0x928] sm:$0xff]
    %v351 = vld [vmem:[#allocation5 + $0x930] sm:$0xff]
    %v352 = vld [vmem:[#allocation5 + $0x938] sm:$0xff]
    %v353 = vld [vmem:[#allocation5 + $0x940] sm:$0xff]
    %v354 = vld [vmem:[#allocation5 + $0x948] sm:$0xff]
    %v355 = vld [vmem:[#allocation5 + $0x950] sm:$0xff]
    %v356 = vld [vmem:[#allocation5 + $0x958] sm:$0xff]
    %v357 = vld [vmem:[#allocation5 + $0x960] sm:$0xff]
    %v358 = vld [vmem:[#allocation5 + $0x968] sm:$0xff]
    %v359 = vld [vmem:[#allocation5 + $0x970] sm:$0xff]
    %v360 = vld [vmem:[#allocation5 + $0x978] sm:$0xff]
    %v361 = vld [vmem:[#allocation5 + $0x980] sm:$0xff]
    %v362 = vld [vmem:[#allocation5 + $0x988] sm:$0xff]
    %v363 = vld [vmem:[#allocation5 + $0x990] sm:$0xff]
    %v364 = vld [vmem:[#allocation5 + $0x998] sm:$0xff]
    %v365 = vld [vmem:[#allocation5 + $0x9a0] sm:$0xff]
    %v366 = vld [vmem:[#allocation5 + $0x9a8] sm:$0xff]
    %v367 = vld [vmem:[#allocation5 + $0x9b0] sm:$0xff]
    %v368 = vld [vmem:[#allocation5 + $0x9b8] sm:$0xff]
    %v369 = vld [vmem:[#allocation5 + $0x9c0] sm:$0xff]
    %v370 = vld [vmem:[#allocation5 + $0x9c8] sm:$0xff]
    %v371 = vld [vmem:[#allocation5 + $0x9d0] sm:$0xff]
    %v372 = vld [vmem:[#allocation5 + $0x9d8] sm:$0xff]
    %v373 = vld [vmem:[#allocation5 + $0x9e0] sm:$0xff]
    %v374 = vld [vmem:[#allocation5 + $0x9e8] sm:$0xff]
    %v375 = vld [vmem:[#allocation5 + $0x9f0] sm:$0xff]
    %v376 = vld [vmem:[#allocation5 + $0x9f8] sm:$0xff]
    %v377 = vld [vmem:[#allocation5 + $0xa00] sm:$0xff]
    %v378 = vld [vmem:[#allocation5 + $0xa08] sm:$0xff]
    %v379 = vld [vmem:[#allocation5 + $0xa10] sm:$0xff]
    %v380 = vld [vmem:[#allocation5 + $0xa18] sm:$0xff]
    %v381 = vld [vmem:[#allocation5 + $0xa20] sm:$0xff]
    %v382 = vld [vmem:[#allocation5 + $0xa28] sm:$0xff]
    %v383 = vld [vmem:[#allocation5 + $0xa30] sm:$0xff]
    %v384 = vld [vmem:[#allocation5 + $0xa38] sm:$0xff]
    %v385 = vld [vmem:[#allocation5 + $0xa40] sm:$0xff]
    %v386 = vld [vmem:[#allocation5 + $0xa48] sm:$0xff]
    %v387 = vld [vmem:[#allocation5 + $0xa50] sm:$0xff]
    %v388 = vld [vmem:[#allocation5 + $0xa58] sm:$0xff]
    %v389 = vld [vmem:[#allocation5 + $0xa60] sm:$0xff]
    %v390 = vld [vmem:[#allocation5 + $0xa68] sm:$0xff]
    %v391 = vld [vmem:[#allocation5 + $0xa70] sm:$0xff]
    %v392 = vld [vmem:[#allocation5 + $0xa78] sm:$0xff]
    %v393 = vld [vmem:[#allocation5 + $0xa80] sm:$0xff]
    %v394 = vld [vmem:[#allocation5 + $0xa88] sm:$0xff]
    %v395 = vld [vmem:[#allocation5 + $0xa90] sm:$0xff]
    %v396 = vld [vmem:[#allocation5 + $0xa98] sm:$0xff]
    %v397 = vld [vmem:[#allocation5 + $0xaa0] sm:$0xff]
    %v398 = vld [vmem:[#allocation5 + $0xaa8] sm:$0xff]
    %v399 = vld [vmem:[#allocation5 + $0xab0] sm:$0xff]
    %v400 = vld [vmem:[#allocation5 + $0xab8] sm:$0xff]
    %v401 = vld [vmem:[#allocation5 + $0xac0] sm:$0xff]
    %v402 = vld [vmem:[#allocation5 + $0xac8] sm:$0xff]
    %v403 = vld [vmem:[#allocation5 + $0xad0] sm:$0xff]
    %v404 = vld [vmem:[#allocation5 + $0xad8] sm:$0xff]
    %v405 = vld [vmem:[#allocation5 + $0xae0] sm:$0xff]
    %v406 = vld [vmem:[#allocation5 + $0xae8] sm:$0xff]
    %v407 = vld [vmem:[#allocation5 + $0xaf0] sm:$0xff]
    %v408 = vld [vmem:[#allocation5 + $0xaf8] sm:$0xff]
    %v409 = vld [vmem:[#allocation5 + $0xb00] sm:$0xff]
    %v410 = vld [vmem:[#allocation5 + $0xb08] sm:$0xff]
    %v411 = vld [vmem:[#allocation5 + $0xb10] sm:$0xff]
    %v412 = vld [vmem:[#allocation5 + $0xb18] sm:$0xff]
    %v413 = vld [vmem:[#allocation5 + $0xb20] sm:$0xff]
    %v414 = vld [vmem:[#allocation5 + $0xb28] sm:$0xff]
    %v415 = vld [vmem:[#allocation5 + $0xb30] sm:$0xff]
    %v416 = vld [vmem:[#allocation5 + $0xb38] sm:$0xff]
    %v417 = vld [vmem:[#allocation5 + $0xb40] sm:$0xff]
    %v418 = vld [vmem:[#allocation5 + $0xb48] sm:$0xff]
    %v419 = vld [vmem:[#allocation5 + $0xb50] sm:$0xff]
    %v420 = vld [vmem:[#allocation5 + $0xb58] sm:$0xff]
    %v421 = vld [vmem:[#allocation5 + $0xb60] sm:$0xff]
    %v422 = vld [vmem:[#allocation5 + $0xb68] sm:$0xff]
    %v423 = vld [vmem:[#allocation5 + $0xb70] sm:$0xff]
    %v424 = vld [vmem:[#allocation5 + $0xb78] sm:$0xff]
    %v425 = vld [vmem:[#allocation5 + $0xb80] sm:$0xff]
    %v426 = vld [vmem:[#allocation5 + $0xb88] sm:$0xff]
    %v427 = vld [vmem:[#allocation5 + $0xb90] sm:$0xff]
    %v428 = vld [vmem:[#allocation5 + $0xb98] sm:$0xff]
    %v429 = vld [vmem:[#allocation5 + $0xba0] sm:$0xff]
    %v430 = vld [vmem:[#allocation5 + $0xba8] sm:$0xff]
    %v431 = vld [vmem:[#allocation5 + $0xbb0] sm:$0xff]
    %v432 = vld [vmem:[#allocation5 + $0xbb8] sm:$0xff]
    %v433 = vld [vmem:[#allocation5 + $0xbc0] sm:$0xff]
    %v434 = vld [vmem:[#allocation5 + $0xbc8] sm:$0xff]
    %v435 = vld [vmem:[#allocation5 + $0xbd0] sm:$0xff]
    %v436 = vld [vmem:[#allocation5 + $0xbd8] sm:$0xff]
    %v437 = vld [vmem:[#allocation5 + $0xbe0] sm:$0xff]
    %v438 = vld [vmem:[#allocation5 + $0xbe8] sm:$0xff]
    %v439 = vld [vmem:[#allocation5 + $0xbf0] sm:$0xff]
    %v440 = vld [vmem:[#allocation5 + $0xbf8] sm:$0xff]
    %v441 = vld [vmem:[#allocation5 + $0xc00] sm:$0xff]
    %v442 = vld [vmem:[#allocation5 + $0xc08] sm:$0xff]
    %v443 = vld [vmem:[#allocation5 + $0xc10] sm:$0xff]
    %v444 = vld [vmem:[#allocation5 + $0xc18] sm:$0xff]
    %v445 = vld [vmem:[#allocation5 + $0xc20] sm:$0xff]
    %v446 = vld [vmem:[#allocation5 + $0xc28] sm:$0xff]
    %v447 = vld [vmem:[#allocation5 + $0xc30] sm:$0xff]
    %v448 = vld [vmem:[#allocation5 + $0xc38] sm:$0xff]
    %v449 = vld [vmem:[#allocation5 + $0xc40] sm:$0xff]
    %v450 = vld [vmem:[#allocation5 + $0xc48] sm:$0xff]
    %v451 = vld [vmem:[#allocation5 + $0xc50] sm:$0xff]
    %v452 = vld [vmem:[#allocation5 + $0xc58] sm:$0xff]
    %v453 = vld [vmem:[#allocation5 + $0xc60] sm:$0xff]
    %v454 = vld [vmem:[#allocation5 + $0xc68] sm:$0xff]
    %v455 = vld [vmem:[#allocation5 + $0xc70] sm:$0xff]
    %v456 = vld [vmem:[#allocation5 + $0xc78] sm:$0xff]
    %v457 = vld [vmem:[#allocation7] sm:$0x1f]
    %v459 = vlaneseq
    %v460 = vshrl.u32 %v459, 7
    %v461 = vsub.s32 0, %v460
    %v462 = vrot.slane %v457, %v461
    %v463 = vlaneseq
    %v464 = vshrl.u32 %v463, 7
    %v465 = vsub.s32 1, %v464
    %v466 = vrot.slane %v457, %v465
    %v467 = vlaneseq
    %v468 = vshrl.u32 %v467, 7
    %v469 = vsub.s32 2, %v468
    %v470 = vrot.slane %v457, %v469
    %v471 = vlaneseq
    %v472 = vshrl.u32 %v471, 7
    %v473 = vsub.s32 3, %v472
    %v474 = vrot.slane %v457, %v473
    %v475 = vlaneseq
    %v476 = vshrl.u32 %v475, 7
    %v477 = vsub.s32 4, %v476
    %v478 = vrot.slane %v457, %v477
    %484 = vmatprep.subr.mxu0 %v58
    %485 = vmatpush1.xpose.msra.mxu0 %v57
    %486 = vmatprep.subr.mxu0 %v63
    %487 = vmatpush1.xpose.msra.mxu0 %v62
    %488 = vmatprep.subr.mxu0 %v68
    %489 = vmatpush1.xpose.msra.mxu0 %v67
    %490 = vmatprep.subr.mxu0 %v73
    %491 = vmatpush1.xpose.msra.mxu0 %v72
    %492 = vmatprep.subr.mxu0 %v78
    %493 = vmatpush1.xpose.msra.mxu0 %v77
    %494 = vmatprep.subr.mxu0 %v83
    %495 = vmatpush1.xpose.msra.mxu0 %v82
    %496 = vmatprep.subr.mxu0 %v88
    %497 = vmatpush1.xpose.msra.mxu0 %v87
    %498 = vmatprep.subr.mxu0 %v93
    %499 = vmatpush1.xpose.msra.mxu0 %v92
    %500 = vmatprep.subr.mxu0 %v98
    %501 = vmatpush1.xpose.msra.mxu0 %v97
    %502 = vmatprep.subr.mxu0 %v103
    %503 = vmatpush1.xpose.msra.mxu0 %v102
    %504 = vmatprep.subr.mxu0 %v108
    %505 = vmatpush1.xpose.msra.mxu0 %v107
    %506 = vmatprep.subr.mxu0 %v113
    %507 = vmatpush1.xpose.msra.mxu0 %v112
    %508 = vmatprep.subr.mxu0 %v118
    %509 = vmatpush1.xpose.msra.mxu0 %v117
    %510 = vmatprep.subr.mxu0 %v123
    %511 = vmatpush1.xpose.msra.mxu0 %v122
    %512 = vmatprep.subr.mxu0 %v128
    %513 = vmatpush1.xpose.msra.mxu0 %v127
    %514 = vmatprep.subr.mxu0 %v133
    %515 = vmatpush1.xpose.msra.mxu0 %v132
    %516 = vmatprep.subr.mxu0 %v138
    %517 = vmatpush1.xpose.msra.mxu0 %v137
    %518 = vmatprep.subr.mxu0 %v143
    %519 = vmatpush1.xpose.msra.mxu0 %v142
    %520 = vmatprep.subr.mxu0 %v148
    %521 = vmatpush1.xpose.msra.mxu0 %v147
    %522 = vmatprep.subr.mxu0 %v153
    %523 = vmatpush1.xpose.msra.mxu0 %v152
    %524 = vmatprep.subr.mxu0 %v158
    %525 = vmatpush1.xpose.msra.mxu0 %v157
    %526 = vmatprep.subr.mxu0 %v163
    %527 = vmatpush1.xpose.msra.mxu0 %v162
    %528 = vmatprep.subr.mxu0 %v168
    %529 = vmatpush1.xpose.msra.mxu0 %v167
    %530 = vmatprep.subr.mxu0 %v173
    %531 = vmatpush1.xpose.msra.mxu0 %v172
    %532 = vmatprep.subr.mxu0 %v178
    %533 = vmatpush1.xpose.msra.mxu0 %v177
    %534 = vmatprep.subr.mxu0 %v183
    %535 = vmatpush1.xpose.msra.mxu0 %v182
    %536 = vmatprep.subr.mxu0 %v188
    %537 = vmatpush1.xpose.msra.mxu0 %v187
    %538 = vmatprep.subr.mxu0 %v193
    %539 = vmatpush1.xpose.msra.mxu0 %v192
    %540 = vmatprep.subr.mxu0 %v198
    %541 = vmatpush1.xpose.msra.mxu0 %v197
    %542 = vmatprep.subr.mxu0 %v203
    %543 = vmatpush1.xpose.msra.mxu0 %v202
    %544 = vmatprep.subr.mxu0 %v208
    %545 = vmatpush1.xpose.msra.mxu0 %v207
    %546 = vmatprep.subr.mxu0 %v213
    %547 = vmatpush1.xpose.msra.mxu0 %v212
    %548 = vmatprep.mubr.f32.mxu0 %v53
    %549 = vmatmul.mubr.f32.gmra.mrb[0].mxu0 %v52
    %v550 = vpop.f32.mrb[0].mxu0
    %v551 = vadd.f32 %v462, %v550
    %v552 = vpop.f32.mrb[0].mxu0
    %v553 = vadd.f32 %v466, %v552
    %554 = vdwg.mxu0
    %555 = vmatprep.subr.mxu0 %v60
    %556 = vmatpush1.xpose.msra.mxu0 %v59
    %557 = vmatprep.subr.mxu0 %v65
    %558 = vmatpush1.xpose.msra.mxu0 %v64
    %559 = vmatprep.subr.mxu0 %v70
    %560 = vmatpush1.xpose.msra.mxu0 %v69
    %561 = vmatprep.subr.mxu0 %v75
    %562 = vmatpush1.xpose.msra.mxu0 %v74
    %563 = vmatprep.subr.mxu0 %v80
    %564 = vmatpush1.xpose.msra.mxu0 %v79
    %565 = vmatprep.subr.mxu0 %v85
    %566 = vmatpush1.xpose.msra.mxu0 %v84
    %567 = vmatprep.subr.mxu0 %v90
    %568 = vmatpush1.xpose.msra.mxu0 %v89
    %569 = vmatprep.subr.mxu0 %v95
    %570 = vmatpush1.xpose.msra.mxu0 %v94
    %571 = vmatprep.subr.mxu0 %v100
    %572 = vmatpush1.xpose.msra.mxu0 %v99
    %573 = vmatprep.subr.mxu0 %v105
    %574 = vmatpush1.xpose.msra.mxu0 %v104
    %575 = vmatprep.subr.mxu0 %v110
    %576 = vmatpush1.xpose.msra.mxu0 %v109
    %577 = vmatprep.subr.mxu0 %v115
    %578 = vmatpush1.xpose.msra.mxu0 %v114
    %579 = vmatprep.subr.mxu0 %v120
    %580 = vmatpush1.xpose.msra.mxu0 %v119
    %581 = vmatprep.subr.mxu0 %v125
    %582 = vmatpush1.xpose.msra.mxu0 %v124
    %583 = vmatprep.subr.mxu0 %v130
    %584 = vmatpush1.xpose.msra.mxu0 %v129
    %585 = vmatprep.subr.mxu0 %v135
    %586 = vmatpush1.xpose.msra.mxu0 %v134
    %587 = vmatprep.subr.mxu0 %v140
    %588 = vmatpush1.xpose.msra.mxu0 %v139
    %589 = vmatprep.subr.mxu0 %v145
    %590 = vmatpush1.xpose.msra.mxu0 %v144
    %591 = vmatprep.subr.mxu0 %v150
    %592 = vmatpush1.xpose.msra.mxu0 %v149
    %593 = vmatprep.subr.mxu0 %v155
    %594 = vmatpush1.xpose.msra.mxu0 %v154
    %595 = vmatprep.subr.mxu0 %v160
    %596 = vmatpush1.xpose.msra.mxu0 %v159
    %597 = vmatprep.subr.mxu0 %v165
    %598 = vmatpush1.xpose.msra.mxu0 %v164
    %599 = vmatprep.subr.mxu0 %v170
    %600 = vmatpush1.xpose.msra.mxu0 %v169
    %601 = vmatprep.subr.mxu0 %v175
    %602 = vmatpush1.xpose.msra.mxu0 %v174
    %603 = vmatprep.subr.mxu0 %v180
    %604 = vmatpush1.xpose.msra.mxu0 %v179
    %605 = vmatprep.subr.mxu0 %v185
    %606 = vmatpush1.xpose.msra.mxu0 %v184
    %607 = vmatprep.subr.mxu0 %v190
    %608 = vmatpush1.xpose.msra.mxu0 %v189
    %609 = vmatprep.subr.mxu0 %v195
    %610 = vmatpush1.xpose.msra.mxu0 %v194
    %611 = vmatprep.subr.mxu0 %v200
    %612 = vmatpush1.xpose.msra.mxu0 %v199
    %613 = vmatprep.subr.mxu0 %v205
    %614 = vmatpush1.xpose.msra.mxu0 %v204
    %615 = vmatprep.subr.mxu0 %v210
    %616 = vmatpush1.xpose.msra.mxu0 %v209
    %617 = vmatprep.subr.mxu0 %v215
    %618 = vmatpush1.xpose.msra.mxu0 %v214
    %619 = vmatprep.mubr.f32.mxu0 %v55
    %620 = vmatmul.mubr.f32.gmra.mrb[0].mxu0 %v54
    %v621 = vpop.f32.mrb[0].mxu0
    %v622 = vadd.f32 %v551, %v621
    %v623 = vpop.f32.mrb[0].mxu0
    %v624 = vadd.f32 %v553, %v623
    %625 = vdwg.mxu0
    %626 = vmatprep.subr.mxu0 0.0
    %627 = vmatpush1.xpose.msra.mxu0 %v61
    %628 = vmatprep.subr.mxu0 0.0
    %629 = vmatpush1.xpose.msra.mxu0 %v66
    %630 = vmatprep.subr.mxu0 0.0
    %631 = vmatpush1.xpose.msra.mxu0 %v71
    %632 = vmatprep.subr.mxu0 0.0
    %633 = vmatpush1.xpose.msra.mxu0 %v76
    %634 = vmatprep.subr.mxu0 0.0
    %635 = vmatpush1.xpose.msra.mxu0 %v81
    %636 = vmatprep.subr.mxu0 0.0
    %637 = vmatpush1.xpose.msra.mxu0 %v86
    %638 = vmatprep.subr.mxu0 0.0
    %639 = vmatpush1.xpose.msra.mxu0 %v91
    %640 = vmatprep.subr.mxu0 0.0
    %641 = vmatpush1.xpose.msra.mxu0 %v96
    %642 = vmatprep.subr.mxu0 0.0
    %643 = vmatpush1.xpose.msra.mxu0 %v101
    %644 = vmatprep.subr.mxu0 0.0
    %645 = vmatpush1.xpose.msra.mxu0 %v106
    %646 = vmatprep.subr.mxu0 0.0
    %647 = vmatpush1.xpose.msra.mxu0 %v111
    %648 = vmatprep.subr.mxu0 0.0
    %649 = vmatpush1.xpose.msra.mxu0 %v116
    %650 = vmatprep.subr.mxu0 0.0
    %651 = vmatpush1.xpose.msra.mxu0 %v121
    %652 = vmatprep.subr.mxu0 0.0
    %653 = vmatpush1.xpose.msra.mxu0 %v126
    %654 = vmatprep.subr.mxu0 0.0
    %655 = vmatpush1.xpose.msra.mxu0 %v131
    %656 = vmatprep.subr.mxu0 0.0
    %657 = vmatpush1.xpose.msra.mxu0 %v136
    %658 = vmatprep.subr.mxu0 0.0
    %659 = vmatpush1.xpose.msra.mxu0 %v141
    %660 = vmatprep.subr.mxu0 0.0
    %661 = vmatpush1.xpose.msra.mxu0 %v146
    %662 = vmatprep.subr.mxu0 0.0
    %663 = vmatpush1.xpose.msra.mxu0 %v151
    %664 = vmatprep.subr.mxu0 0.0
    %665 = vmatpush1.xpose.msra.mxu0 %v156
    %666 = vmatprep.subr.mxu0 0.0
    %667 = vmatpush1.xpose.msra.mxu0 %v161
    %668 = vmatprep.subr.mxu0 0.0
    %669 = vmatpush1.xpose.msra.mxu0 %v166
    %670 = vmatprep.subr.mxu0 0.0
    %671 = vmatpush1.xpose.msra.mxu0 %v171
    %672 = vmatprep.subr.mxu0 0.0
    %673 = vmatpush1.xpose.msra.mxu0 %v176
    %674 = vmatprep.subr.mxu0 0.0
    %675 = vmatpush1.xpose.msra.mxu0 %v181
    %676 = vmatprep.subr.mxu0 0.0
    %677 = vmatpush1.xpose.msra.mxu0 %v186
    %678 = vmatprep.subr.mxu0 0.0
    %679 = vmatpush1.xpose.msra.mxu0 %v191
    %680 = vmatprep.subr.mxu0 0.0
    %681 = vmatpush1.xpose.msra.mxu0 %v196
    %682 = vmatprep.subr.mxu0 0.0
    %683 = vmatpush1.xpose.msra.mxu0 %v201
    %684 = vmatprep.subr.mxu0 0.0
    %685 = vmatpush1.xpose.msra.mxu0 %v206
    %686 = vmatprep.subr.mxu0 0.0
    %687 = vmatpush1.xpose.msra.mxu0 %v211
    %688 = vmatprep.subr.mxu0 0.0
    %689 = vmatpush1.xpose.msra.mxu0 %v216
    %690 = vmatprep.mubr.f32.mxu0 0.0
    %691 = vmatmul.mubr.f32.gmra.mrb[0].mxu0 %v56
    %v692 = vpop.f32.mrb[0].mxu0
    %v693 = vadd.f32 %v622, %v692
    %v694 = vpop.f32.mrb[0].mxu0
    %v695 = vadd.f32 %v624, %v694
    %696 = vdwg.mxu0
    %697 = vmatprep.subr.mxu0 %v218
    %698 = vmatpush1.xpose.msra.mxu0 %v217
    %699 = vmatprep.subr.mxu0 %v223
    %700 = vmatpush1.xpose.msra.mxu0 %v222
    %701 = vmatprep.subr.mxu0 %v228
    %702 = vmatpush1.xpose.msra.mxu0 %v227
    %703 = vmatprep.subr.mxu0 %v233
    %704 = vmatpush1.xpose.msra.mxu0 %v232
    %705 = vmatprep.subr.mxu0 %v238
    %706 = vmatpush1.xpose.msra.mxu0 %v237
    %707 = vmatprep.subr.mxu0 %v243
    %708 = vmatpush1.xpose.msra.mxu0 %v242
    %709 = vmatprep.subr.mxu0 %v248
    %710 = vmatpush1.xpose.msra.mxu0 %v247
    %711 = vmatprep.subr.mxu0 %v253
    %712 = vmatpush1.xpose.msra.mxu0 %v252
    %713 = vmatprep.subr.mxu0 %v258
    %714 = vmatpush1.xpose.msra.mxu0 %v257
    %715 = vmatprep.subr.mxu0 %v263
    %716 = vmatpush1.xpose.msra.mxu0 %v262
    %717 = vmatprep.subr.mxu0 %v268
    %718 = vmatpush1.xpose.msra.mxu0 %v267
    %719 = vmatprep.subr.mxu0 %v273
    %720 = vmatpush1.xpose.msra.mxu0 %v272
    %721 = vmatprep.subr.mxu0 %v278
    %722 = vmatpush1.xpose.msra.mxu0 %v277
    %723 = vmatprep.subr.mxu0 %v283
    %724 = vmatpush1.xpose.msra.mxu0 %v282
    %725 = vmatprep.subr.mxu0 %v288
    %726 = vmatpush1.xpose.msra.mxu0 %v287
    %727 = vmatprep.subr.mxu0 %v293
    %728 = vmatpush1.xpose.msra.mxu0 %v292
    %729 = vmatprep.subr.mxu0 %v298
    %730 = vmatpush1.xpose.msra.mxu0 %v297
    %731 = vmatprep.subr.mxu0 %v303
    %732 = vmatpush1.xpose.msra.mxu0 %v302
    %733 = vmatprep.subr.mxu0 %v308
    %734 = vmatpush1.xpose.msra.mxu0 %v307
    %735 = vmatprep.subr.mxu0 %v313
    %736 = vmatpush1.xpose.msra.mxu0 %v312
    %737 = vmatprep.subr.mxu0 %v318
    %738 = vmatpush1.xpose.msra.mxu0 %v317
    %739 = vmatprep.subr.mxu0 %v323
    %740 = vmatpush1.xpose.msra.mxu0 %v322
    %741 = vmatprep.subr.mxu0 %v328
    %742 = vmatpush1.xpose.msra.mxu0 %v327
    %743 = vmatprep.subr.mxu0 %v333
    %744 = vmatpush1.xpose.msra.mxu0 %v332
    %745 = vmatprep.subr.mxu0 %v338
    %746 = vmatpush1.xpose.msra.mxu0 %v337
    %747 = vmatprep.subr.mxu0 %v343
    %748 = vmatpush1.xpose.msra.mxu0 %v342
    %749 = vmatprep.subr.mxu0 %v348
    %750 = vmatpush1.xpose.msra.mxu0 %v347
    %751 = vmatprep.subr.mxu0 %v353
    %752 = vmatpush1.xpose.msra.mxu0 %v352
    %753 = vmatprep.subr.mxu0 %v358
    %754 = vmatpush1.xpose.msra.mxu0 %v357
    %755 = vmatprep.subr.mxu0 %v363
    %756 = vmatpush1.xpose.msra.mxu0 %v362
    %757 = vmatprep.subr.mxu0 %v368
    %758 = vmatpush1.xpose.msra.mxu0 %v367
    %759 = vmatprep.subr.mxu0 %v373
    %760 = vmatpush1.xpose.msra.mxu0 %v372
    %761 = vmatprep.mubr.f32.mxu0 %v53
    %762 = vmatmul.mubr.f32.gmra.mrb[0].mxu0 %v52
    %v763 = vpop.f32.mrb[0].mxu0
    %v764 = vadd.f32 %v470, %v763
    %v765 = vpop.f32.mrb[0].mxu0
    %v766 = vadd.f32 %v474, %v765
    %767 = vdwg.mxu0
    %768 = vmatprep.subr.mxu0 %v220
    %769 = vmatpush1.xpose.msra.mxu0 %v219
    %770 = vmatprep.subr.mxu0 %v225
    %771 = vmatpush1.xpose.msra.mxu0 %v224
    %772 = vmatprep.subr.mxu0 %v230
    %773 = vmatpush1.xpose.msra.mxu0 %v229
    %774 = vmatprep.subr.mxu0 %v235
    %775 = vmatpush1.xpose.msra.mxu0 %v234
    %776 = vmatprep.subr.mxu0 %v240
    %777 = vmatpush1.xpose.msra.mxu0 %v239
    %778 = vmatprep.subr.mxu0 %v245
    %779 = vmatpush1.xpose.msra.mxu0 %v244
    %780 = vmatprep.subr.mxu0 %v250
    %781 = vmatpush1.xpose.msra.mxu0 %v249
    %782 = vmatprep.subr.mxu0 %v255
    %783 = vmatpush1.xpose.msra.mxu0 %v254
    %784 = vmatprep.subr.mxu0 %v260
    %785 = vmatpush1.xpose.msra.mxu0 %v259
    %786 = vmatprep.subr.mxu0 %v265
    %787 = vmatpush1.xpose.msra.mxu0 %v264
    %788 = vmatprep.subr.mxu0 %v270
    %789 = vmatpush1.xpose.msra.mxu0 %v269
    %790 = vmatprep.subr.mxu0 %v275
    %791 = vmatpush1.xpose.msra.mxu0 %v274
    %792 = vmatprep.subr.mxu0 %v280
    %793 = vmatpush1.xpose.msra.mxu0 %v279
    %794 = vmatprep.subr.mxu0 %v285
    %795 = vmatpush1.xpose.msra.mxu0 %v284
    %796 = vmatprep.subr.mxu0 %v290
    %797 = vmatpush1.xpose.msra.mxu0 %v289
    %798 = vmatprep.subr.mxu0 %v295
    %799 = vmatpush1.xpose.msra.mxu0 %v294
    %800 = vmatprep.subr.mxu0 %v300
    %801 = vmatpush1.xpose.msra.mxu0 %v299
    %802 = vmatprep.subr.mxu0 %v305
    %803 = vmatpush1.xpose.msra.mxu0 %v304
    %804 = vmatprep.subr.mxu0 %v310
    %805 = vmatpush1.xpose.msra.mxu0 %v309
    %806 = vmatprep.subr.mxu0 %v315
    %807 = vmatpush1.xpose.msra.mxu0 %v314
    %808 = vmatprep.subr.mxu0 %v320
    %809 = vmatpush1.xpose.msra.mxu0 %v319
    %810 = vmatprep.subr.mxu0 %v325
    %811 = vmatpush1.xpose.msra.mxu0 %v324
    %812 = vmatprep.subr.mxu0 %v330
    %813 = vmatpush1.xpose.msra.mxu0 %v329
    %814 = vmatprep.subr.mxu0 %v335
    %815 = vmatpush1.xpose.msra.mxu0 %v334
    %816 = vmatprep.subr.mxu0 %v340
    %817 = vmatpush1.xpose.msra.mxu0 %v339
    %818 = vmatprep.subr.mxu0 %v345
    %819 = vmatpush1.xpose.msra.mxu0 %v344
    %820 = vmatprep.subr.mxu0 %v350
    %821 = vmatpush1.xpose.msra.mxu0 %v349
    %822 = vmatprep.subr.mxu0 %v355
    %823 = vmatpush1.xpose.msra.mxu0 %v354
    %824 = vmatprep.subr.mxu0 %v360
    %825 = vmatpush1.xpose.msra.mxu0 %v359
    %826 = vmatprep.subr.mxu0 %v365
    %827 = vmatpush1.xpose.msra.mxu0 %v364
    %828 = vmatprep.subr.mxu0 %v370
    %829 = vmatpush1.xpose.msra.mxu0 %v369
    %830 = vmatprep.subr.mxu0 %v375
    %831 = vmatpush1.xpose.msra.mxu0 %v374
    %832 = vmatprep.mubr.f32.mxu0 %v55
    %833 = vmatmul.mubr.f32.gmra.mrb[0].mxu0 %v54
    %v834 = vpop.f32.mrb[0].mxu0
    %v835 = vadd.f32 %v764, %v834
    %v836 = vpop.f32.mrb[0].mxu0
    %v837 = vadd.f32 %v766, %v836
    %838 = vdwg.mxu0
    %839 = vmatprep.subr.mxu0 0.0
    %840 = vmatpush1.xpose.msra.mxu0 %v221
    %841 = vmatprep.subr.mxu0 0.0
    %842 = vmatpush1.xpose.msra.mxu0 %v226
    %843 = vmatprep.subr.mxu0 0.0
    %844 = vmatpush1.xpose.msra.mxu0 %v231
    %845 = vmatprep.subr.mxu0 0.0
    %846 = vmatpush1.xpose.msra.mxu0 %v236
    %847 = vmatprep.subr.mxu0 0.0
    %848 = vmatpush1.xpose.msra.mxu0 %v241
    %849 = vmatprep.subr.mxu0 0.0
    %850 = vmatpush1.xpose.msra.mxu0 %v246
    %851 = vmatprep.subr.mxu0 0.0
    %852 = vmatpush1.xpose.msra.mxu0 %v251
    %853 = vmatprep.subr.mxu0 0.0
    %854 = vmatpush1.xpose.msra.mxu0 %v256
    %855 = vmatprep.subr.mxu0 0.0
    %856 = vmatpush1.xpose.msra.mxu0 %v261
    %857 = vmatprep.subr.mxu0 0.0
    %858 = vmatpush1.xpose.msra.mxu0 %v266
    %859 = vmatprep.subr.mxu0 0.0
    %860 = vmatpush1.xpose.msra.mxu0 %v271
    %861 = vmatprep.subr.mxu0 0.0
    %862 = vmatpush1.xpose.msra.mxu0 %v276
    %863 = vmatprep.subr.mxu0 0.0
    %864 = vmatpush1.xpose.msra.mxu0 %v281
    %865 = vmatprep.subr.mxu0 0.0
    %866 = vmatpush1.xpose.msra.mxu0 %v286
    %867 = vmatprep.subr.mxu0 0.0
    %868 = vmatpush1.xpose.msra.mxu0 %v291
    %869 = vmatprep.subr.mxu0 0.0
    %870 = vmatpush1.xpose.msra.mxu0 %v296
    %871 = vmatprep.subr.mxu0 0.0
    %872 = vmatpush1.xpose.msra.mxu0 %v301
    %873 = vmatprep.subr.mxu0 0.0
    %874 = vmatpush1.xpose.msra.mxu0 %v306
    %875 = vmatprep.subr.mxu0 0.0
    %876 = vmatpush1.xpose.msra.mxu0 %v311
    %877 = vmatprep.subr.mxu0 0.0
    %878 = vmatpush1.xpose.msra.mxu0 %v316
    %879 = vmatprep.subr.mxu0 0.0
    %880 = vmatpush1.xpose.msra.mxu0 %v321
    %881 = vmatprep.subr.mxu0 0.0
    %882 = vmatpush1.xpose.msra.mxu0 %v326
    %883 = vmatprep.subr.mxu0 0.0
    %884 = vmatpush1.xpose.msra.mxu0 %v331
    %885 = vmatprep.subr.mxu0 0.0
    %886 = vmatpush1.xpose.msra.mxu0 %v336
    %887 = vmatprep.subr.mxu0 0.0
    %888 = vmatpush1.xpose.msra.mxu0 %v341
    %889 = vmatprep.subr.mxu0 0.0
    %890 = vmatpush1.xpose.msra.mxu0 %v346
    %891 = vmatprep.subr.mxu0 0.0
    %892 = vmatpush1.xpose.msra.mxu0 %v351
    %893 = vmatprep.subr.mxu0 0.0
    %894 = vmatpush1.xpose.msra.mxu0 %v356
    %895 = vmatprep.subr.mxu0 0.0
    %896 = vmatpush1.xpose.msra.mxu0 %v361
    %897 = vmatprep.subr.mxu0 0.0
    %898 = vmatpush1.xpose.msra.mxu0 %v366
    %899 = vmatprep.subr.mxu0 0.0
    %900 = vmatpush1.xpose.msra.mxu0 %v371
    %901 = vmatprep.subr.mxu0 0.0
    %902 = vmatpush1.xpose.msra.mxu0 %v376
    %903 = vmatprep.mubr.f32.mxu0 0.0
    %904 = vmatmul.mubr.f32.gmra.mrb[0].mxu0 %v56
    %v905 = vpop.f32.mrb[0].mxu0
    %v906 = vadd.f32 %v835, %v905
    %v907 = vpop.f32.mrb[0].mxu0
    %v908 = vadd.f32 %v837, %v907
    %909 = vdwg.mxu0
    %910 = vmatprep.subr.mxu0 %v378
    %911 = vmatpush1.xpose.msra.mxu0 %v377
    %912 = vmatprep.subr.mxu0 %v383
    %913 = vmatpush1.xpose.msra.mxu0 %v382
    %914 = vmatprep.subr.mxu0 %v388
    %915 = vmatpush1.xpose.msra.mxu0 %v387
    %916 = vmatprep.subr.mxu0 %v393
    %917 = vmatpush1.xpose.msra.mxu0 %v392
    %918 = vmatprep.subr.mxu0 %v398
    %919 = vmatpush1.xpose.msra.mxu0 %v397
    %920 = vmatprep.subr.mxu0 %v403
    %921 = vmatpush1.xpose.msra.mxu0 %v402
    %922 = vmatprep.subr.mxu0 %v408
    %923 = vmatpush1.xpose.msra.mxu0 %v407
    %924 = vmatprep.subr.mxu0 %v413
    %925 = vmatpush1.xpose.msra.mxu0 %v412
    %926 = vmatprep.subr.mxu0 %v418
    %927 = vmatpush1.xpose.msra.mxu0 %v417
    %928 = vmatprep.subr.mxu0 %v423
    %929 = vmatpush1.xpose.msra.mxu0 %v422
    %930 = vmatprep.subr.mxu0 %v428
    %931 = vmatpush1.xpose.msra.mxu0 %v427
    %932 = vmatprep.subr.mxu0 %v433
    %933 = vmatpush1.xpose.msra.mxu0 %v432
    %934 = vmatprep.subr.mxu0 %v438
    %935 = vmatpush1.xpose.msra.mxu0 %v437
    %936 = vmatprep.subr.mxu0 %v443
    %937 = vmatpush1.xpose.msra.mxu0 %v442
    %938 = vmatprep.subr.mxu0 %v448
    %939 = vmatpush1.xpose.msra.mxu0 %v447
    %940 = vmatprep.subr.mxu0 %v453
    %941 = vmatpush1.xpose.msra.mxu0 %v452
    %942 = vmatprep.subr.mxu0 0.0
    %943 = vmatpush1.xpose.msra.mxu0 0.0
    %944 = vmatprep.subr.mxu0 0.0
    %945 = vmatpush1.xpose.msra.mxu0 0.0
    %946 = vmatprep.subr.mxu0 0.0
    %947 = vmatpush1.xpose.msra.mxu0 0.0
    %948 = vmatprep.subr.mxu0 0.0
    %949 = vmatpush1.xpose.msra.mxu0 0.0
    %950 = vmatprep.subr.mxu0 0.0
    %951 = vmatpush1.xpose.msra.mxu0 0.0
    %952 = vmatprep.subr.mxu0 0.0
    %953 = vmatpush1.xpose.msra.mxu0 0.0
    %954 = vmatprep.subr.mxu0 0.0
    %955 = vmatpush1.xpose.msra.mxu0 0.0
    %956 = vmatprep.subr.mxu0 0.0
    %957 = vmatpush1.xpose.msra.mxu0 0.0
    %958 = vmatprep.subr.mxu0 0.0
    %959 = vmatpush1.xpose.msra.mxu0 0.0
    %960 = vmatprep.subr.mxu0 0.0
    %961 = vmatpush1.xpose.msra.mxu0 0.0
    %962 = vmatprep.subr.mxu0 0.0
    %963 = vmatpush1.xpose.msra.mxu0 0.0
    %964 = vmatprep.subr.mxu0 0.0
    %965 = vmatpush1.xpose.msra.mxu0 0.0
    %966 = vmatprep.subr.mxu0 0.0
    %967 = vmatpush1.xpose.msra.mxu0 0.0
    %968 = vmatprep.subr.mxu0 0.0
    %969 = vmatpush1.xpose.msra.mxu0 0.0
    %970 = vmatprep.subr.mxu0 0.0
    %971 = vmatpush1.xpose.msra.mxu0 0.0
    %972 = vmatprep.subr.mxu0 0.0
    %973 = vmatpush1.xpose.msra.mxu0 0.0
    %974 = vmatprep.mubr.f32.mxu0 %v53
    %975 = vmatmul.mubr.f32.gmra.mrb[0].mxu0 %v52
    %v976 = vpop.f32.mrb[0].mxu0
    %v977 = vadd.f32 %v478, %v976
    %v978 = vpop.f32.mrb[0].mxu0
    %979 = vdwg.mxu0
    %980 = vmatprep.subr.mxu0 %v380
    %981 = vmatpush1.xpose.msra.mxu0 %v379
    %982 = vmatprep.subr.mxu0 %v385
    %983 = vmatpush1.xpose.msra.mxu0 %v384
    %984 = vmatprep.subr.mxu0 %v390
    %985 = vmatpush1.xpose.msra.mxu0 %v389
    %986 = vmatprep.subr.mxu0 %v395
    %987 = vmatpush1.xpose.msra.mxu0 %v394
    %988 = vmatprep.subr.mxu0 %v400
    %989 = vmatpush1.xpose.msra.mxu0 %v399
    %990 = vmatprep.subr.mxu0 %v405
    %991 = vmatpush1.xpose.msra.mxu0 %v404
    %992 = vmatprep.subr.mxu0 %v410
    %993 = vmatpush1.xpose.msra.mxu0 %v409
    %994 = vmatprep.subr.mxu0 %v415
    %995 = vmatpush1.xpose.msra.mxu0 %v414
    %996 = vmatprep.subr.mxu0 %v420
    %997 = vmatpush1.xpose.msra.mxu0 %v419
    %998 = vmatprep.subr.mxu0 %v425
    %999 = vmatpush1.xpose.msra.mxu0 %v424
    %1000 = vmatprep.subr.mxu0 %v430
    %1001 = vmatpush1.xpose.msra.mxu0 %v429
    %1002 = vmatprep.subr.mxu0 %v435
    %1003 = vmatpush1.xpose.msra.mxu0 %v434
    %1004 = vmatprep.subr.mxu0 %v440
    %1005 = vmatpush1.xpose.msra.mxu0 %v439
    %1006 = vmatprep.subr.mxu0 %v445
    %1007 = vmatpush1.xpose.msra.mxu0 %v444
    %1008 = vmatprep.subr.mxu0 %v450
    %1009 = vmatpush1.xpose.msra.mxu0 %v449
    %1010 = vmatprep.subr.mxu0 %v455
    %1011 = vmatpush1.xpose.msra.mxu0 %v454
    %1012 = vmatprep.subr.mxu0 0.0
    %1013 = vmatpush1.xpose.msra.mxu0 0.0
    %1014 = vmatprep.subr.mxu0 0.0
    %1015 = vmatpush1.xpose.msra.mxu0 0.0
    %1016 = vmatprep.subr.mxu0 0.0
    %1017 = vmatpush1.xpose.msra.mxu0 0.0
    %1018 = vmatprep.subr.mxu0 0.0
    %1019 = vmatpush1.xpose.msra.mxu0 0.0
    %1020 = vmatprep.subr.mxu0 0.0
    %1021 = vmatpush1.xpose.msra.mxu0 0.0
    %1022 = vmatprep.subr.mxu0 0.0
    %1023 = vmatpush1.xpose.msra.mxu0 0.0
    %1024 = vmatprep.subr.mxu0 0.0
    %1025 = vmatpush1.xpose.msra.mxu0 0.0
    %1026 = vmatprep.subr.mxu0 0.0
    %1027 = vmatpush1.xpose.msra.mxu0 0.0
    %1028 = vmatprep.subr.mxu0 0.0
    %1029 = vmatpush1.xpose.msra.mxu0 0.0
    %1030 = vmatprep.subr.mxu0 0.0
    %1031 = vmatpush1.xpose.msra.mxu0 0.0
    %1032 = vmatprep.subr.mxu0 0.0
    %1033 = vmatpush1.xpose.msra.mxu0 0.0
    %1034 = vmatprep.subr.mxu0 0.0
    %1035 = vmatpush1.xpose.msra.mxu0 0.0
    %1036 = vmatprep.subr.mxu0 0.0
    %1037 = vmatpush1.xpose.msra.mxu0 0.0
    %1038 = vmatprep.subr.mxu0 0.0
    %1039 = vmatpush1.xpose.msra.mxu0 0.0
    %1040 = vmatprep.subr.mxu0 0.0
    %1041 = vmatpush1.xpose.msra.mxu0 0.0
    %1042 = vmatprep.subr.mxu0 0.0
    %1043 = vmatpush1.xpose.msra.mxu0 0.0
    %1044 = vmatprep.mubr.f32.mxu0 %v55
    %1045 = vmatmul.mubr.f32.gmra.mrb[0].mxu0 %v54
    %v1046 = vpop.f32.mrb[0].mxu0
    %v1047 = vadd.f32 %v977, %v1046
    %v1048 = vpop.f32.mrb[0].mxu0
    %1049 = vdwg.mxu0
    %1050 = vmatprep.subr.mxu0 0.0
    %1051 = vmatpush1.xpose.msra.mxu0 %v381
    %1052 = vmatprep.subr.mxu0 0.0
    %1053 = vmatpush1.xpose.msra.mxu0 %v386
    %1054 = vmatprep.subr.mxu0 0.0
    %1055 = vmatpush1.xpose.msra.mxu0 %v391
    %1056 = vmatprep.subr.mxu0 0.0
    %1057 = vmatpush1.xpose.msra.mxu0 %v396
    %1058 = vmatprep.subr.mxu0 0.0
    %1059 = vmatpush1.xpose.msra.mxu0 %v401
    %1060 = vmatprep.subr.mxu0 0.0
    %1061 = vmatpush1.xpose.msra.mxu0 %v406
    %1062 = vmatprep.subr.mxu0 0.0
    %1063 = vmatpush1.xpose.msra.mxu0 %v411
    %1064 = vmatprep.subr.mxu0 0.0
    %1065 = vmatpush1.xpose.msra.mxu0 %v416
    %1066 = vmatprep.subr.mxu0 0.0
    %1067 = vmatpush1.xpose.msra.mxu0 %v421
    %1068 = vmatprep.subr.mxu0 0.0
    %1069 = vmatpush1.xpose.msra.mxu0 %v426
    %1070 = vmatprep.subr.mxu0 0.0
    %1071 = vmatpush1.xpose.msra.mxu0 %v431
    %1072 = vmatprep.subr.mxu0 0.0
    %1073 = vmatpush1.xpose.msra.mxu0 %v436
    %1074 = vmatprep.subr.mxu0 0.0
    %1075 = vmatpush1.xpose.msra.mxu0 %v441
    %1076 = vmatprep.subr.mxu0 0.0
    %1077 = vmatpush1.xpose.msra.mxu0 %v446
    %1078 = vmatprep.subr.mxu0 0.0
    %1079 = vmatpush1.xpose.msra.mxu0 %v451
    %1080 = vmatprep.subr.mxu0 0.0
    %1081 = vmatpush1.xpose.msra.mxu0 %v456
    %1082 = vmatprep.subr.mxu0 0.0
    %1083 = vmatpush1.xpose.msra.mxu0 0.0
    %1084 = vmatprep.subr.mxu0 0.0
    %1085 = vmatpush1.xpose.msra.mxu0 0.0
    %1086 = vmatprep.subr.mxu0 0.0
    %1087 = vmatpush1.xpose.msra.mxu0 0.0
    %1088 = vmatprep.subr.mxu0 0.0
    %1089 = vmatpush1.xpose.msra.mxu0 0.0
    %1090 = vmatprep.subr.mxu0 0.0
    %1091 = vmatpush1.xpose.msra.mxu0 0.0
    %1092 = vmatprep.subr.mxu0 0.0
    %1093 = vmatpush1.xpose.msra.mxu0 0.0
    %1094 = vmatprep.subr.mxu0 0.0
    %1095 = vmatpush1.xpose.msra.mxu0 0.0
    %1096 = vmatprep.subr.mxu0 0.0
    %1097 = vmatpush1.xpose.msra.mxu0 0.0
    %1098 = vmatprep.subr.mxu0 0.0
    %1099 = vmatpush1.xpose.msra.mxu0 0.0
    %1100 = vmatprep.subr.mxu0 0.0
    %1101 = vmatpush1.xpose.msra.mxu0 0.0
    %1102 = vmatprep.subr.mxu0 0.0
    %1103 = vmatpush1.xpose.msra.mxu0 0.0
    %1104 = vmatprep.subr.mxu0 0.0
    %1105 = vmatpush1.xpose.msra.mxu0 0.0
    %1106 = vmatprep.subr.mxu0 0.0
    %1107 = vmatpush1.xpose.msra.mxu0 0.0
    %1108 = vmatprep.subr.mxu0 0.0
    %1109 = vmatpush1.xpose.msra.mxu0 0.0
    %1110 = vmatprep.subr.mxu0 0.0
    %1111 = vmatpush1.xpose.msra.mxu0 0.0
    %1112 = vmatprep.subr.mxu0 0.0
    %1113 = vmatpush1.xpose.msra.mxu0 0.0
    %1114 = vmatprep.mubr.f32.mxu0 0.0
    %1115 = vmatmul.mubr.f32.gmra.mrb[0].mxu0 %v56
    %v1116 = vpop.f32.mrb[0].mxu0
    %v1117 = vadd.f32 %v1047, %v1116
    %v1118 = vpop.f32.mrb[0].mxu0
    %1119 = vdwg.mxu0
    %1120 = vst [vmem:[#allocation8] sm:$0xff] %v693
    %1121 = vst [vmem:[#allocation8 + $0x8] sm:$0xff] %v695
    %1122 = vst [vmem:[#allocation8 + $0x10] sm:$0xff] %v906
    %1123 = vst [vmem:[#allocation8 + $0x18] sm:$0xff] %v908
    %1124 = vst [vmem:[#allocation8 + $0x20] sm:$0xff] %v1117
    // Predicated region
    $region26: #{tpu_custom_call.1} parent=1 // pred_check
      _
    $region27: #{tpu_custom_call.1} parent=1 // pred_check_branch
      %1126 = sbr.rel (0) target = $region29
    $region28: #{tpu_custom_call.1} parent=1 // pred_region
      %s1128 = ssub.s32 640, 640
      %1129 = vsyncadd [#allocation4], %s1128
      %s1131 = sshll.u32 [#allocation8], 4
      %s1132 = int_to_ptr.vmem [resolvable:$true] %s1131
      %1134 = dma.vmem_to_hbm [thread:$0]  %s1132, 640, %s3, [#allocation4]
    $region29: #{tpu_custom_call.1} parent=1 // pred_fallthru
      _
    // Predicated region
    $region30: #{tpu_custom_call.1} parent=1 // pred_check
      _
    $region31: #{tpu_custom_call.1} parent=1 // pred_check_branch
      %1136 = sbr.rel (0) target = $region33
    $region32: #{tpu_custom_call.1} parent=1 // pred_region
      %1137 = dma.done [#allocation4], 640
    $region33: #{tpu_custom_call.1} parent=1 // pred_fallthru
      _
    %1138 = vsyncpa [#allocation3], 1
    %1139 = vsyncpa [#allocation6], 1
    %1140 = vsyncpa [#allocation4], 1

</llo_original>
